<compile_context>
chip_gen: v6e
topology: v6e:2x2x1
jax: 0.10.0
libtpu: 0.0.40
codegen_flags: <defaults>
</compile_context>

<pallas_src>
import functools

import jax
import jax.numpy as jnp
from jax.experimental import pallas as pl
from jax.experimental.pallas import tpu as pltpu


# ---------------------------------------------------------------------------
# Pallas kernel: grid = (batch blocks, HW chunks [reduction, innermost]).
# ---------------------------------------------------------------------------
def _channel_attention_kernel(
    x_ref,      # (Bb, C, THW)  native NCHW (spatial flattened onto lanes)
    s_ref,      # (Bb, 1, S)    style vectors
    wcat_ref,   # (S, 2*WD + hid + C)   packed [wh1 | wb1 | wh3 | wb3]
    bcat_ref,   # (1, 2*WD + hid + C)   packed [bh1 | bb1 | bh3 | bb3]
    p1m_ref,    # (C,   WD*hid)  p1 rearranged: p1m[c, w*hid + j] = p1[w, j*C + c]
    p3m_ref,    # (hid, WD*C)    p3 rearranged: p3m[j, w*C   + o] = p3[w, o*hid + j]
    o_ref,      # (Bb, 1, C)     sigmoid channel-attention weights
    sum_sc,     # (Bb, C) f32    running sum over HW
    max_sc,     # (Bb, C) f32    running max over HW
    *, hid, c, wd, hw, thw, ragged,
):
    j = pl.program_id(1)
    nhw = pl.num_programs(1)
    bb = o_ref.shape[0]

    @pl.when(j == 0)
    def _init():
        sum_sc[...] = jnp.zeros_like(sum_sc)
        max_sc[...] = jnp.full_like(max_sc, -jnp.inf)

    # --- streaming avg/max pooling over this HW chunk (no f32 copy of x) ----
    xc = x_ref[...]                                        # (Bb, C, THW), native dtype
    if ragged:
        # last HW chunk runs past the array; mask the out-of-bounds lanes
        base = j * thw
        idx = jax.lax.broadcasted_iota(jnp.int32, xc.shape, 2)
        valid = (base + idx) < hw
        xc_sum = jnp.where(valid, xc, jnp.zeros_like(xc))
        xc_max = jnp.where(valid, xc, jnp.full_like(xc, -jnp.inf))
    else:
        xc_sum = xc
        xc_max = xc
    sum_sc[...] = sum_sc[...] + jnp.sum(xc_sum, axis=-1, dtype=jnp.float32)
    max_sc[...] = jnp.maximum(max_sc[...],
                              jnp.max(xc_max, axis=-1).astype(jnp.float32))

    # --- finalize: hyper-net on pooled activations, write attention weights -
    @pl.when(j == nhw - 1)
    def _finalize():
        s = s_ref[...].astype(jnp.float32).reshape(bb, -1)  # (Bb, S)
        avg = sum_sc[...] * jnp.float32(1.0 / hw)           # (Bb, C)
        mx = max_sc[...]                                     # (Bb, C)
        pooled = jnp.concatenate([avg, mx], axis=0)          # (2Bb, C): [avg; max]

        # batched style projections: one matmul for code1 | b1 | code3 | b3
        s2 = jnp.concatenate([s, s], axis=0)                 # rows r / Bb+r = sample r
        packed = (jnp.dot(s2, wcat_ref[...],
                          preferred_element_type=jnp.float32)
                  + bcat_ref[...])                           # (2Bb, 2*WD+hid+C)
        code1 = packed[:, 0:wd]                              # (2Bb, WD)
        b1 = packed[:, wd:wd + hid]                          # (2Bb, hid)
        code3 = packed[:, wd + hid:2 * wd + hid]             # (2Bb, WD)
        b3 = packed[:, 2 * wd + hid:]                        # (2Bb, C)

        # hyperConv fc1: shared P1 contracted with pooled first (MXU),
        # then a WD-term per-sample multiply-add (VPU)
        t1 = jnp.dot(pooled, p1m_ref[...],
                     preferred_element_type=jnp.float32)     # (2Bb, WD*hid)
        h = b1
        for w in range(wd):
            h = h + t1[:, w * hid:(w + 1) * hid] * code1[:, w:w + 1]
        h = jnp.where(h > 0, h, 0.2 * h)                     # LeakyReLU(0.2)

        # hyperConv fc3
        t3 = jnp.dot(h, p3m_ref[...],
                     preferred_element_type=jnp.float32)     # (2Bb, WD*C)
        y = b3
        for w in range(wd):
            y = y + t3[:, w * c:(w + 1) * c] * code3[:, w:w + 1]

        out = y[:bb, :] + y[bb:, :]                          # avg branch + max branch
        o_ref[...] = (1.0 / (1.0 + jnp.exp(-out))).reshape(bb, 1, c).astype(o_ref.dtype)


def _largest_divisor_leq(n: int, cap: int) -> int:
    cap = max(1, min(n, cap))
    for d in range(cap, 0, -1):
        if n % d == 0:
            return d
    return 1


# ---------------------------------------------------------------------------
# Wrapper: parameter packing + (batch, HW-chunk) blocked pallas_call.
# No layout transpose of x and no zero-pad copy of x.
# ---------------------------------------------------------------------------
def channel_attention_pallas(x_nchw, s, params, *, hid=None, block_bytes=None):
    (wh1, bh1, p1, wb1, bb1, wh3, bh3, p3, wb3, bb3) = params
    B, C, H, W = x_nchw.shape
    S = s.shape[1]
    HW = H * W
    WD = wh1.shape[1]
    hid = wb1.shape[1] if hid is None else hid

    # x stays in NCHW; flattening the spatial dims is a free, contiguous reshape.
    x3 = x_nchw.reshape(B, C, HW)
    s3 = s.reshape(B, 1, S)
    itemsize = x3.dtype.itemsize

    # Pack the 10 tiny hyper-net parameters into 4 tensors (one-time, tiny).
    wcat = jnp.concatenate([wh1, wb1, wh3, wb3], axis=1)       # (S, 2*WD+hid+C)
    bcat = jnp.concatenate([bh1, bb1, bh3, bb3], axis=1)       # (1, 2*WD+hid+C)
    p1m = p1.reshape(WD, hid, C).transpose(2, 0, 1).reshape(C, WD * hid)
    p3m = p3.reshape(WD, C, hid).transpose(2, 0, 1).reshape(hid, WD * C)

    # --- generation-aware block sizing ------------------------------------
    try:
        vmem_cap = int(pltpu.get_tpu_info().vmem_capacity_bytes)
    except Exception:
        vmem_cap = 64 << 20                      # conservative (v7x per-TC)
    if block_bytes is None:
        # ~8 MiB x per step (double-buffered 16 MiB) — near HBM roofline on
        # v5e/v6e, within v7x's 64 MiB VMEM; scale down on smaller VMEM.
        block_bytes = min(8 << 20, max(1 << 20, vmem_cap // 8))

    per_sample = C * HW * itemsize
    if per_sample <= block_bytes:
        # Whole samples per block; Bb divides B so x is never zero-padded.
        Bb = _largest_divisor_leq(B, max(1, block_bytes // per_sample))
        # Megacore (v7x) gets work from >=2 batch steps, but only split when
        # the halved block stays >= 2 MiB (otherwise it just hurts v5e/v6e).
        if B >= 2 and B // Bb < 2:
            half = _largest_divisor_leq(B, max(1, Bb // 2))
            if half < Bb and half * per_sample >= (2 << 20):
                Bb = half
        THW = HW
    else:
        # Chunk the spatial axis instead (lane dim must be a multiple of 128).
        Bb = 1
        THW = (block_bytes // (C * itemsize)) // 128 * 128
        THW = int(min(max(128, THW), HW))

    batch_steps = B // Bb
    hw_steps = pl.cdiv(HW, THW)
    ragged = (HW % THW) != 0

    xblk_bytes = Bb * C * THW * itemsize
    vmem_limit = max(2 * xblk_bytes + (6 << 20), 16 << 20)
    vmem_limit = int(min(vmem_limit, max(int(0.9 * vmem_cap),
                                         2 * xblk_bytes + (6 << 20))))

    const_spec = lambda arr: pl.BlockSpec(arr.shape, lambda i, j: (0, 0))

    out = pl.pallas_call(
        functools.partial(_channel_attention_kernel, hid=hid, c=C, wd=WD,
                          hw=HW, thw=THW, ragged=ragged),
        out_shape=jax.ShapeDtypeStruct((B, 1, C), jnp.float32),
        grid=(batch_steps, hw_steps),
        in_specs=[
            pl.BlockSpec((Bb, C, THW), lambda i, j: (i, 0, j)),  # x (NCHW native)
            pl.BlockSpec((Bb, 1, S), lambda i, j: (i, 0, 0)),    # style
            const_spec(wcat), const_spec(bcat),
            const_spec(p1m), const_spec(p3m),
        ],
        out_specs=pl.BlockSpec((Bb, 1, C), lambda i, j: (i, 0, 0)),
        scratch_shapes=[pltpu.VMEM((Bb, C), jnp.float32),   # running sum
                        pltpu.VMEM((Bb, C), jnp.float32)],  # running max
        compiler_params=pltpu.CompilerParams(
            dimension_semantics=("parallel", "arbitrary"),
            vmem_limit_bytes=vmem_limit),
    )(x3, s3, wcat, bcat, p1m, p3m)

    # match PyTorch output shape: (B, C, 1, 1)
    return out.reshape(B, C, 1, 1)


# ---------------------------------------------------------------------------
# Pure-JAX reference (same math, NCHW) for correctness checking
# ---------------------------------------------------------------------------
def channel_attention_reference(x_nchw, s, params, *, hid):
    (wh1, bh1, p1, wb1, bb1, wh3, bh3, p3, wb3, bb3) = params
    B, C, H, W = x_nchw.shape

    def hyper_1x1(v, wh, bh, p, wb, bb, out_dim, in_dim):
        code = s @ wh + bh                                 # (B, wd)
        k = (code @ p).reshape(B, out_dim, in_dim)         # per-sample 1x1 conv weight
        b = s @ wb + bb                                    # (B, out_dim)
        return jnp.einsum("boi,bi->bo", k, v) + b

    def branch(v):
        h = hyper_1x1(v, wh1, bh1, p1, wb1, bb1, hid, C)
        h = jnp.where(h > 0, h, 0.2 * h)                   # LeakyReLU(0.2)
        return hyper_1x1(h, wh3, bh3, p3, wb3, bb3, C, hid)

    avg = jnp.mean(x_nchw, axis=(2, 3))
    mx = jnp.max(x_nchw, axis=(2, 3))
    out = jax.nn.sigmoid(branch(avg) + branch(mx))
    return out.reshape(B, C, 1, 1)


# ---------------------------------------------------------------------------
if __name__ == "__main__":
    # Small shapes consistent with the module
    B, C, H, W = 2, 32, 16, 16       # in_planes = 32
    RATIO = 4                        # hidden = in_planes // ratio = 8
    HID = C // RATIO
    STYLE_DIM = 64
    WEIGHT_DIM = 8

    key = jax.random.PRNGKey(0)
    ks = jax.random.split(key, 16)

    x = jax.random.normal(ks[0], (B, C, H, W), dtype=jnp.float32)
    s = jax.random.normal(ks[1], (B, STYLE_DIM), dtype=jnp.float32)

    sc = 0.1  # deterministic small init for the hypernetwork parameters
    params = (
        jax.random.normal(ks[2], (STYLE_DIM, WEIGHT_DIM), jnp.float32) * sc,   # wh1
        jax.random.normal(ks[3], (1, WEIGHT_DIM), jnp.float32) * sc,           # bh1
        jax.random.normal(ks[4], (WEIGHT_DIM, HID * C), jnp.float32) * sc,     # p1 (kernel: hid x C)
        jax.random.normal(ks[5], (STYLE_DIM, HID), jnp.float32) * sc,          # wb1
        jax.random.normal(ks[6], (1, HID), jnp.float32) * sc,                  # bb1
        jax.random.normal(ks[7], (STYLE_DIM, WEIGHT_DIM), jnp.float32) * sc,   # wh3
        jax.random.normal(ks[8], (1, WEIGHT_DIM), jnp.float32) * sc,           # bh3
        jax.random.normal(ks[9], (WEIGHT_DIM, C * HID), jnp.float32) * sc,     # p3 (kernel: C x hid)
        jax.random.normal(ks[10], (STYLE_DIM, C), jnp.float32) * sc,           # wb3
        jax.random.normal(ks[11], (1, C), jnp.float32) * sc,                   # bb3
    )

    # Test 1: default sizing (single HW chunk, whole batch per step)
    out = channel_attention_pallas(x, s, params, hid=HID)
    out = jax.block_until_ready(out)
    ref = channel_attention_reference(x, s, params, hid=HID)
    assert out.shape == (B, C, 1, 1)
    assert jnp.allclose(out, ref, atol=2e-3, rtol=2e-3), (
        f"max abs diff {jnp.max(jnp.abs(out - ref))}")

    # Test 2: force the chunked-HW / ragged-tail / Bb=1 path (small block cap)
    B2, H2, W2 = 3, 20, 20
    x2 = jax.random.normal(ks[12], (B2, C, H2, W2), dtype=jnp.float32)
    s2 = jax.random.normal(ks[13], (B2, STYLE_DIM), dtype=jnp.float32)
    out2 = channel_attention_pallas(x2, s2, params, hid=HID, block_bytes=32 * 1024)
    out2 = jax.block_until_ready(out2)
    ref2 = channel_attention_reference(x2, s2, params, hid=HID)
    assert out2.shape == (B2, C, 1, 1)
    assert jnp.allclose(out2, ref2, atol=2e-3, rtol=2e-3), (
        f"max abs diff {jnp.max(jnp.abs(out2 - ref2))}")

    print("KERNEL_OK")
</pallas_src>

<mosaic_0001>
module attributes {stable_mosaic.version = 11 : i64} {
  func.func @_channel_attention_kernel(%arg0: i32, %arg1: i32, %arg2: memref<2x32x256xf32, #tpu.memory_space<vmem>>, %arg3: memref<2x1x64xf32, #tpu.memory_space<vmem>>, %arg4: memref<64x56xf32, #tpu.memory_space<vmem>>, %arg5: memref<1x56xf32, #tpu.memory_space<vmem>>, %arg6: memref<32x64xf32, #tpu.memory_space<vmem>>, %arg7: memref<8x256xf32, #tpu.memory_space<vmem>>, %arg8: memref<2x1x32xf32, #tpu.memory_space<vmem>>, %arg9: memref<2x32xf32, #tpu.memory_space<vmem>>, %arg10: memref<2x32xf32, #tpu.memory_space<vmem>>) attributes {dimension_semantics = [#tpu.dimension_semantics<parallel>, #tpu.dimension_semantics<arbitrary>], iteration_bounds = array<i64: 1, 1>, scalar_prefetch = 0 : i64, scratch_operands = 2 : i64, tpu.core_type = #tpu.core_type<tc>, window_params = [{transform_indices = @transform_0, window_bounds = array<i64: 2, 32, 256>}, {transform_indices = @transform_1, window_bounds = array<i64: 2, 1, 64>}, {pipeline_mode = #tpu.pipeline_mode<synchronous>, transform_indices = @transform_2, window_bounds = array<i64: 64, 56>}, {pipeline_mode = #tpu.pipeline_mode<synchronous>, transform_indices = @transform_3, window_bounds = array<i64: 1, 56>}, {pipeline_mode = #tpu.pipeline_mode<synchronous>, transform_indices = @transform_4, window_bounds = array<i64: 32, 64>}, {pipeline_mode = #tpu.pipeline_mode<synchronous>, transform_indices = @transform_5, window_bounds = array<i64: 8, 256>}, {transform_indices = @transform_6, window_bounds = array<i64: 2, 1, 32>}]} {
    %c0_i32 = arith.constant 0 : i32
    %0 = arith.cmpi eq, %arg1, %c0_i32 : i32
    %1 = arith.extui %0 : i1 to i32
    %c0_i32_0 = arith.constant 0 : i32
    %2 = arith.cmpi ne, %1, %c0_i32_0 : i32
    scf.if %2 {
      %cst_14 = arith.constant 0.000000e+00 : f32
      %15 = vector.broadcast %cst_14 : f32 to vector<2x32xf32>
      %c0_15 = arith.constant 0 : index
      %c0_16 = arith.constant 0 : index
      %16 = vector.load %arg9[%c0_15, %c0_16] : memref<2x32xf32, #tpu.memory_space<vmem>>, vector<2x32xf32>
      tpu.vector_store %arg9[%c0_15, %c0_16], %15 {strides = array<i32>} : memref<2x32xf32, #tpu.memory_space<vmem>>, vector<2x32xf32>,
      %cst_17 = arith.constant 0xFF800000 : f32
      %17 = vector.broadcast %cst_17 : f32 to vector<2x32xf32>
      %c0_18 = arith.constant 0 : index
      %c0_19 = arith.constant 0 : index
      %18 = vector.load %arg10[%c0_18, %c0_19] : memref<2x32xf32, #tpu.memory_space<vmem>>, vector<2x32xf32>
      tpu.vector_store %arg10[%c0_18, %c0_19], %17 {strides = array<i32>} : memref<2x32xf32, #tpu.memory_space<vmem>>, vector<2x32xf32>,
    } else {
    }
    %c0 = arith.constant 0 : index
    %c0_1 = arith.constant 0 : index
    %c0_2 = arith.constant 0 : index
    %3 = vector.load %arg2[%c0, %c0_1, %c0_2] : memref<2x32x256xf32, #tpu.memory_space<vmem>>, vector<2x32x256xf32>
    %c0_3 = arith.constant 0 : index
    %c0_4 = arith.constant 0 : index
    %4 = vector.load %arg9[%c0_3, %c0_4] : memref<2x32xf32, #tpu.memory_space<vmem>>, vector<2x32xf32>
    %cst = arith.constant dense<0.000000e+00> : vector<2x32xf32>
    %5 = vector.multi_reduction <add>, %3, %cst [2] : vector<2x32x256xf32> to vector<2x32xf32>
    %6 = arith.addf %4, %5 : vector<2x32xf32>
    %c0_5 = arith.constant 0 : index
    %c0_6 = arith.constant 0 : index
    %7 = vector.load %arg9[%c0_5, %c0_6] : memref<2x32xf32, #tpu.memory_space<vmem>>, vector<2x32xf32>
    tpu.vector_store %arg9[%c0_5, %c0_6], %6 {strides = array<i32>} : memref<2x32xf32, #tpu.memory_space<vmem>>, vector<2x32xf32>,
    %c0_7 = arith.constant 0 : index
    %c0_8 = arith.constant 0 : index
    %8 = vector.load %arg10[%c0_7, %c0_8] : memref<2x32xf32, #tpu.memory_space<vmem>>, vector<2x32xf32>
    %cst_9 = arith.constant dense<0xFF800000> : vector<2x32xf32>
    %9 = vector.multi_reduction <maximumf>, %3, %cst_9 [2] : vector<2x32x256xf32> to vector<2x32xf32>
    %10 = arith.maximumf %8, %9 : vector<2x32xf32>
    %c0_10 = arith.constant 0 : index
    %c0_11 = arith.constant 0 : index
    %11 = vector.load %arg10[%c0_10, %c0_11] : memref<2x32xf32, #tpu.memory_space<vmem>>, vector<2x32xf32>
    tpu.vector_store %arg10[%c0_10, %c0_11], %10 {strides = array<i32>} : memref<2x32xf32, #tpu.memory_space<vmem>>, vector<2x32xf32>,
    %c0_i32_12 = arith.constant 0 : i32
    %12 = arith.cmpi eq, %arg1, %c0_i32_12 : i32
    %13 = arith.extui %12 : i1 to i32
    %c0_i32_13 = arith.constant 0 : i32
    %14 = arith.cmpi ne, %13, %c0_i32_13 : i32
    scf.if %14 {
      %c0_14 = arith.constant 0 : index
      %c0_15 = arith.constant 0 : index
      %c0_16 = arith.constant 0 : index
      %15 = vector.load %arg3[%c0_14, %c0_15, %c0_16] : memref<2x1x64xf32, #tpu.memory_space<vmem>>, vector<2x1x64xf32>
      %16 = vector.shape_cast %15 : vector<2x1x64xf32> to vector<2x64xf32>
      %c0_17 = arith.constant 0 : index
      %c0_18 = arith.constant 0 : index
      %17 = vector.load %arg9[%c0_17, %c0_18] : memref<2x32xf32, #tpu.memory_space<vmem>>, vector<2x32xf32>
      %cst_19 = arith.constant 3.906250e-03 : f32
      %18 = vector.broadcast %cst_19 : f32 to vector<2x32xf32>
      %19 = arith.mulf %17, %18 : vector<2x32xf32>
      %c0_20 = arith.constant 0 : index
      %c0_21 = arith.constant 0 : index
      %20 = vector.load %arg10[%c0_20, %c0_21] : memref<2x32xf32, #tpu.memory_space<vmem>>, vector<2x32xf32>
      %21 = tpu.concatenate %19, %20 in 0 : vector<2x32xf32>, vector<2x32xf32> -> vector<4x32xf32>
      %22 = tpu.concatenate %16, %16 in 0 : vector<2x64xf32>, vector<2x64xf32> -> vector<4x64xf32>
      %c0_22 = arith.constant 0 : index
      %c0_23 = arith.constant 0 : index
      %23 = vector.load %arg4[%c0_22, %c0_23] : memref<64x56xf32, #tpu.memory_space<vmem>>, vector<64x56xf32>
      %cst_24 = arith.constant dense<0.000000e+00> : vector<4x56xf32>
      %24 = tpu.matmul %22, %23, %cst_24 {dimension_numbers = #tpu.dot_dimension_numbers<[1], [0], [0], [1], [0, 0, 1, 1], [], []>} : vector<4x64xf32>, vector<64x56xf32>, vector<4x56xf32> -> vector<4x56xf32>
      %c0_25 = arith.constant 0 : index
      %c0_26 = arith.constant 0 : index
      %25 = vector.load %arg5[%c0_25, %c0_26] : memref<1x56xf32, #tpu.memory_space<vmem>>, vector<1x56xf32>
      %26 = vector.broadcast %25 : vector<1x56xf32> to vector<4x56xf32>
      %27 = arith.addf %24, %26 : vector<4x56xf32>
      %28 = vector.extract_strided_slice %27 {offsets = [0, 0], sizes = [4, 8], strides = [1, 1]} : vector<4x56xf32> to vector<4x8xf32>
      %29 = vector.extract_strided_slice %27 {offsets = [0, 8], sizes = [4, 8], strides = [1, 1]} : vector<4x56xf32> to vector<4x8xf32>
      %30 = vector.extract_strided_slice %27 {offsets = [0, 16], sizes = [4, 8], strides = [1, 1]} : vector<4x56xf32> to vector<4x8xf32>
      %31 = vector.extract_strided_slice %27 {offsets = [0, 24], sizes = [4, 32], strides = [1, 1]} : vector<4x56xf32> to vector<4x32xf32>
      %c0_27 = arith.constant 0 : index
      %c0_28 = arith.constant 0 : index
      %32 = vector.load %arg6[%c0_27, %c0_28] : memref<32x64xf32, #tpu.memory_space<vmem>>, vector<32x64xf32>
      %cst_29 = arith.constant dense<0.000000e+00> : vector<4x64xf32>
      %33 = tpu.matmul %21, %32, %cst_29 {dimension_numbers = #tpu.dot_dimension_numbers<[1], [0], [0], [1], [0, 0, 1, 1], [], []>} : vector<4x32xf32>, vector<32x64xf32>, vector<4x64xf32> -> vector<4x64xf32>
      %34 = vector.extract_strided_slice %33 {offsets = [0, 0], sizes = [4, 8], strides = [1, 1]} : vector<4x64xf32> to vector<4x8xf32>
      %35 = vector.extract_strided_slice %28 {offsets = [0, 0], sizes = [4, 1], strides = [1, 1]} : vector<4x8xf32> to vector<4x1xf32>
      %36 = vector.broadcast %35 : vector<4x1xf32> to vector<4x8xf32>
      %37 = arith.mulf %34, %36 : vector<4x8xf32>
      %38 = arith.addf %29, %37 : vector<4x8xf32>
      %39 = vector.extract_strided_slice %33 {offsets = [0, 8], sizes = [4, 8], strides = [1, 1]} : vector<4x64xf32> to vector<4x8xf32>
      %40 = vector.extract_strided_slice %28 {offsets = [0, 1], sizes = [4, 1], strides = [1, 1]} : vector<4x8xf32> to vector<4x1xf32>
      %41 = vector.broadcast %40 : vector<4x1xf32> to vector<4x8xf32>
      %42 = arith.mulf %39, %41 : vector<4x8xf32>
      %43 = arith.addf %38, %42 : vector<4x8xf32>
      %44 = vector.extract_strided_slice %33 {offsets = [0, 16], sizes = [4, 8], strides = [1, 1]} : vector<4x64xf32> to vector<4x8xf32>
      %45 = vector.extract_strided_slice %28 {offsets = [0, 2], sizes = [4, 1], strides = [1, 1]} : vector<4x8xf32> to vector<4x1xf32>
      %46 = vector.broadcast %45 : vector<4x1xf32> to vector<4x8xf32>
      %47 = arith.mulf %44, %46 : vector<4x8xf32>
      %48 = arith.addf %43, %47 : vector<4x8xf32>
      %49 = vector.extract_strided_slice %33 {offsets = [0, 24], sizes = [4, 8], strides = [1, 1]} : vector<4x64xf32> to vector<4x8xf32>
      %50 = vector.extract_strided_slice %28 {offsets = [0, 3], sizes = [4, 1], strides = [1, 1]} : vector<4x8xf32> to vector<4x1xf32>
      %51 = vector.broadcast %50 : vector<4x1xf32> to vector<4x8xf32>
      %52 = arith.mulf %49, %51 : vector<4x8xf32>
      %53 = arith.addf %48, %52 : vector<4x8xf32>
      %54 = vector.extract_strided_slice %33 {offsets = [0, 32], sizes = [4, 8], strides = [1, 1]} : vector<4x64xf32> to vector<4x8xf32>
      %55 = vector.extract_strided_slice %28 {offsets = [0, 4], sizes = [4, 1], strides = [1, 1]} : vector<4x8xf32> to vector<4x1xf32>
      %56 = vector.broadcast %55 : vector<4x1xf32> to vector<4x8xf32>
      %57 = arith.mulf %54, %56 : vector<4x8xf32>
      %58 = arith.addf %53, %57 : vector<4x8xf32>
      %59 = vector.extract_strided_slice %33 {offsets = [0, 40], sizes = [4, 8], strides = [1, 1]} : vector<4x64xf32> to vector<4x8xf32>
      %60 = vector.extract_strided_slice %28 {offsets = [0, 5], sizes = [4, 1], strides = [1, 1]} : vector<4x8xf32> to vector<4x1xf32>
      %61 = vector.broadcast %60 : vector<4x1xf32> to vector<4x8xf32>
      %62 = arith.mulf %59, %61 : vector<4x8xf32>
      %63 = arith.addf %58, %62 : vector<4x8xf32>
      %64 = vector.extract_strided_slice %33 {offsets = [0, 48], sizes = [4, 8], strides = [1, 1]} : vector<4x64xf32> to vector<4x8xf32>
      %65 = vector.extract_strided_slice %28 {offsets = [0, 6], sizes = [4, 1], strides = [1, 1]} : vector<4x8xf32> to vector<4x1xf32>
      %66 = vector.broadcast %65 : vector<4x1xf32> to vector<4x8xf32>
      %67 = arith.mulf %64, %66 : vector<4x8xf32>
      %68 = arith.addf %63, %67 : vector<4x8xf32>
      %69 = vector.extract_strided_slice %33 {offsets = [0, 56], sizes = [4, 8], strides = [1, 1]} : vector<4x64xf32> to vector<4x8xf32>
      %70 = vector.extract_strided_slice %28 {offsets = [0, 7], sizes = [4, 1], strides = [1, 1]} : vector<4x8xf32> to vector<4x1xf32>
      %71 = vector.broadcast %70 : vector<4x1xf32> to vector<4x8xf32>
      %72 = arith.mulf %69, %71 : vector<4x8xf32>
      %73 = arith.addf %68, %72 : vector<4x8xf32>
      %cst_30 = arith.constant 0.000000e+00 : f32
      %74 = vector.broadcast %cst_30 : f32 to vector<4x8xf32>
      %75 = arith.cmpf ogt, %73, %74 : vector<4x8xf32>
      %cst_31 = arith.constant 2.000000e-01 : f32
      %76 = vector.broadcast %cst_31 : f32 to vector<4x8xf32>
      %77 = arith.mulf %76, %73 : vector<4x8xf32>
      %78 = arith.select %75, %73, %77 : vector<4x8xi1>, vector<4x8xf32>
      %c0_32 = arith.constant 0 : index
      %c0_33 = arith.constant 0 : index
      %79 = vector.load %arg7[%c0_32, %c0_33] : memref<8x256xf32, #tpu.memory_space<vmem>>, vector<8x256xf32>
      %cst_34 = arith.constant dense<0.000000e+00> : vector<4x256xf32>
      %80 = tpu.matmul %78, %79, %cst_34 {dimension_numbers = #tpu.dot_dimension_numbers<[1], [0], [0], [1], [0, 0, 1, 1], [], []>} : vector<4x8xf32>, vector<8x256xf32>, vector<4x256xf32> -> vector<4x256xf32>
      %81 = vector.extract_strided_slice %80 {offsets = [0, 0], sizes = [4, 32], strides = [1, 1]} : vector<4x256xf32> to vector<4x32xf32>
      %82 = vector.extract_strided_slice %30 {offsets = [0, 0], sizes = [4, 1], strides = [1, 1]} : vector<4x8xf32> to vector<4x1xf32>
      %83 = vector.broadcast %82 : vector<4x1xf32> to vector<4x32xf32>
      %84 = arith.mulf %81, %83 : vector<4x32xf32>
      %85 = arith.addf %31, %84 : vector<4x32xf32>
      %86 = vector.extract_strided_slice %80 {offsets = [0, 32], sizes = [4, 32], strides = [1, 1]} : vector<4x256xf32> to vector<4x32xf32>
      %87 = vector.extract_strided_slice %30 {offsets = [0, 1], sizes = [4, 1], strides = [1, 1]} : vector<4x8xf32> to vector<4x1xf32>
      %88 = vector.broadcast %87 : vector<4x1xf32> to vector<4x32xf32>
      %89 = arith.mulf %86, %88 : vector<4x32xf32>
      %90 = arith.addf %85, %89 : vector<4x32xf32>
      %91 = vector.extract_strided_slice %80 {offsets = [0, 64], sizes = [4, 32], strides = [1, 1]} : vector<4x256xf32> to vector<4x32xf32>
      %92 = vector.extract_strided_slice %30 {offsets = [0, 2], sizes = [4, 1], strides = [1, 1]} : vector<4x8xf32> to vector<4x1xf32>
      %93 = vector.broadcast %92 : vector<4x1xf32> to vector<4x32xf32>
      %94 = arith.mulf %91, %93 : vector<4x32xf32>
      %95 = arith.addf %90, %94 : vector<4x32xf32>
      %96 = vector.extract_strided_slice %80 {offsets = [0, 96], sizes = [4, 32], strides = [1, 1]} : vector<4x256xf32> to vector<4x32xf32>
      %97 = vector.extract_strided_slice %30 {offsets = [0, 3], sizes = [4, 1], strides = [1, 1]} : vector<4x8xf32> to vector<4x1xf32>
      %98 = vector.broadcast %97 : vector<4x1xf32> to vector<4x32xf32>
      %99 = arith.mulf %96, %98 : vector<4x32xf32>
      %100 = arith.addf %95, %99 : vector<4x32xf32>
      %101 = vector.extract_strided_slice %80 {offsets = [0, 128], sizes = [4, 32], strides = [1, 1]} : vector<4x256xf32> to vector<4x32xf32>
      %102 = vector.extract_strided_slice %30 {offsets = [0, 4], sizes = [4, 1], strides = [1, 1]} : vector<4x8xf32> to vector<4x1xf32>
      %103 = vector.broadcast %102 : vector<4x1xf32> to vector<4x32xf32>
      %104 = arith.mulf %101, %103 : vector<4x32xf32>
      %105 = arith.addf %100, %104 : vector<4x32xf32>
      %106 = vector.extract_strided_slice %80 {offsets = [0, 160], sizes = [4, 32], strides = [1, 1]} : vector<4x256xf32> to vector<4x32xf32>
      %107 = vector.extract_strided_slice %30 {offsets = [0, 5], sizes = [4, 1], strides = [1, 1]} : vector<4x8xf32> to vector<4x1xf32>
      %108 = vector.broadcast %107 : vector<4x1xf32> to vector<4x32xf32>
      %109 = arith.mulf %106, %108 : vector<4x32xf32>
      %110 = arith.addf %105, %109 : vector<4x32xf32>
      %111 = vector.extract_strided_slice %80 {offsets = [0, 192], sizes = [4, 32], strides = [1, 1]} : vector<4x256xf32> to vector<4x32xf32>
      %112 = vector.extract_strided_slice %30 {offsets = [0, 6], sizes = [4, 1], strides = [1, 1]} : vector<4x8xf32> to vector<4x1xf32>
      %113 = vector.broadcast %112 : vector<4x1xf32> to vector<4x32xf32>
      %114 = arith.mulf %111, %113 : vector<4x32xf32>
      %115 = arith.addf %110, %114 : vector<4x32xf32>
      %116 = vector.extract_strided_slice %80 {offsets = [0, 224], sizes = [4, 32], strides = [1, 1]} : vector<4x256xf32> to vector<4x32xf32>
      %117 = vector.extract_strided_slice %30 {offsets = [0, 7], sizes = [4, 1], strides = [1, 1]} : vector<4x8xf32> to vector<4x1xf32>
      %118 = vector.broadcast %117 : vector<4x1xf32> to vector<4x32xf32>
      %119 = arith.mulf %116, %118 : vector<4x32xf32>
      %120 = arith.addf %115, %119 : vector<4x32xf32>
      %121 = vector.extract_strided_slice %120 {offsets = [0, 0], sizes = [2, 32], strides = [1, 1]} : vector<4x32xf32> to vector<2x32xf32>
      %122 = vector.extract_strided_slice %120 {offsets = [2, 0], sizes = [2, 32], strides = [1, 1]} : vector<4x32xf32> to vector<2x32xf32>
      %123 = arith.addf %121, %122 : vector<2x32xf32>
      %cst_35 = arith.constant 0.000000e+00 : f32
      %124 = vector.broadcast %cst_35 : f32 to vector<2x32xf32>
      %125 = arith.subf %124, %123 : vector<2x32xf32>
      %126 = math.exp %125 : vector<2x32xf32>
      %cst_36 = arith.constant 1.000000e+00 : f32
      %127 = vector.broadcast %cst_36 : f32 to vector<2x32xf32>
      %128 = arith.addf %127, %126 : vector<2x32xf32>
      %cst_37 = arith.constant 1.000000e+00 : f32
      %129 = vector.broadcast %cst_37 : f32 to vector<2x32xf32>
      %130 = arith.divf %129, %128 : vector<2x32xf32>
      %131 = vector.shape_cast %130 : vector<2x32xf32> to vector<2x1x32xf32>
      %c0_38 = arith.constant 0 : index
      %c0_39 = arith.constant 0 : index
      %c0_40 = arith.constant 0 : index
      %132 = vector.load %arg8[%c0_38, %c0_39, %c0_40] : memref<2x1x32xf32, #tpu.memory_space<vmem>>, vector<2x1x32xf32>
      tpu.vector_store %arg8[%c0_38, %c0_39, %c0_40], %131 {strides = array<i32>} : memref<2x1x32xf32, #tpu.memory_space<vmem>>, vector<2x1x32xf32>,
    } else {
    }
    return
  }
  func.func @transform_0(%arg0: i32, %arg1: i32) -> (i32, i32, i32) {
    %c0_i32 = arith.constant 0 : i32
    %c0_i32_0 = arith.constant 0 : i32
    return %arg0, %c0_i32, %arg1 : i32, i32, i32
  }
  func.func @transform_1(%arg0: i32, %arg1: i32) -> (i32, i32, i32) {
    %c0_i32 = arith.constant 0 : i32
    %c0_i32_0 = arith.constant 0 : i32
    %c0_i32_1 = arith.constant 0 : i32
    return %arg0, %c0_i32, %c0_i32_0 : i32, i32, i32
  }
  func.func @transform_2(%arg0: i32, %arg1: i32) -> (i32, i32) {
    %c0_i32 = arith.constant 0 : i32
    %c0_i32_0 = arith.constant 0 : i32
    %c0_i32_1 = arith.constant 0 : i32
    return %c0_i32, %c0_i32_0 : i32, i32
  }
  func.func @transform_3(%arg0: i32, %arg1: i32) -> (i32, i32) {
    %c0_i32 = arith.constant 0 : i32
    %c0_i32_0 = arith.constant 0 : i32
    %c0_i32_1 = arith.constant 0 : i32
    return %c0_i32, %c0_i32_0 : i32, i32
  }
  func.func @transform_4(%arg0: i32, %arg1: i32) -> (i32, i32) {
    %c0_i32 = arith.constant 0 : i32
    %c0_i32_0 = arith.constant 0 : i32
    %c0_i32_1 = arith.constant 0 : i32
    return %c0_i32, %c0_i32_0 : i32, i32
  }
  func.func @transform_5(%arg0: i32, %arg1: i32) -> (i32, i32) {
    %c0_i32 = arith.constant 0 : i32
    %c0_i32_0 = arith.constant 0 : i32
    %c0_i32_1 = arith.constant 0 : i32
    return %c0_i32, %c0_i32_0 : i32, i32
  }
  func.func @transform_6(%arg0: i32, %arg1: i32) -> (i32, i32, i32) {
    %c0_i32 = arith.constant 0 : i32
    %c0_i32_0 = arith.constant 0 : i32
    %c0_i32_1 = arith.constant 0 : i32
    return %arg0, %c0_i32, %c0_i32_0 : i32, i32, i32
  }
}

</mosaic_0001>

<llo_original>
// kernel: tpu_custom_call.1
$region0: #{tpu_custom_call.1}
  #allocation0 [shape = 'u32[]', space=smem, size = 0x4, offset = 0x4, fixed_abs, tag = 'smem constant byte address 0x4 - core index']
  #allocation1 [shape = 'u32[144,128]{1,0:T(1,128)}', space=vmem, size = 0x12000, scoped, tag = 'internal scratch']
  #allocation2 [shape = 'f32[2,32]{1,0:T(2,128)}', space=vmem, size = 0x400, scoped, tag = 'scratch operand']
  #allocation3 [shape = 'f32[2,32]{1,0:T(2,128)}', space=vmem, size = 0x400, scoped, tag = 'scratch operand']
  %s0 = inlined_call_operand.hbm [shape: f32[2,32,256], index: 0, kind: input, shape index: {}]
  %s1 = inlined_call_operand.vmem [shape: f32[2,1,64], index: 1, kind: input, shape index: {}]
  %s2 = inlined_call_operand.vmem [shape: f32[64,56], index: 2, kind: input, shape index: {}]
  %s3 = inlined_call_operand.vmem [shape: f32[1,56], index: 3, kind: input, shape index: {}]
  %s4 = inlined_call_operand.vmem [shape: f32[32,64], index: 4, kind: input, shape index: {}]
  %s5 = inlined_call_operand.vmem [shape: f32[8,256], index: 5, kind: input, shape index: {}]
  %s6 = inlined_call_operand.hbm [shape: f32[2,1,32], index: 6, kind: output, shape index: {}]
  %s7 = sld [smem:[#allocation0]]
  $region46: #{tpu_custom_call.1} parent=0
    _
  %s9 = ssub.s32 1, %s7
  %s10 = scalar_select 0, %s9, %s7
  $region1: #{tpu_custom_call.1} parent=0
    #allocation4 [shape = 'u8[65536]{0}', space=vmem, size = 0x10000, scoped, tag = 'input window, operand 0, single buffered']
    #allocation5 [shape = 's32[1]{0}', space=sflag, size = 0x4, scoped, tag = 'scoped memory for tpu_custom_call.1']
    #allocation6 [shape = 's32[1]{0}', space=sflag, size = 0x4, scoped, tag = 'scoped memory for tpu_custom_call.1']
    #allocation7 [shape = 'u8[1024]{0}', space=vmem, size = 0x400, scoped, tag = 'output window, operand 0, single buffered']
    %11 = vsyncpa [#allocation5], 0
    %12 = vsyncpa [#allocation6], 0
    // Predicated region
    $region2: #{tpu_custom_call.1} parent=1 // pred_check
      _
    $region3: #{tpu_custom_call.1} parent=1 // pred_check_branch
      %14 = sbr.rel (0) target = $region5
    $region4: #{tpu_custom_call.1} parent=1 // pred_region
      %s16 = ssub.s32 2048, 2048
      %17 = vsyncadd [#allocation5], %s16
      %s18 = sshll.u32 [#allocation4], 4
      %s19 = int_to_ptr.vmem [resolvable:$true] %s18
      %24 = dma.hbm_to_vmem [thread:$0]  %s0, 2048, %s19, [#allocation5], 256, 256, 16
    $region5: #{tpu_custom_call.1} parent=1 // pred_fallthru
      _
    // Predicated region
    $region6: #{tpu_custom_call.1} parent=1 // pred_check
      _
    $region7: #{tpu_custom_call.1} parent=1 // pred_check_branch
      %26 = sbr.rel (0) target = $region9
    $region8: #{tpu_custom_call.1} parent=1 // pred_region
      _
    $region9: #{tpu_custom_call.1} parent=1 // pred_fallthru
      _
    // Predicated region
    $region10: #{tpu_custom_call.1} parent=1 // pred_check
      _
    $region11: #{tpu_custom_call.1} parent=1 // pred_check_branch
      %28 = sbr.rel (0) target = $region13
    $region12: #{tpu_custom_call.1} parent=1 // pred_region
      _
    $region13: #{tpu_custom_call.1} parent=1 // pred_fallthru
      _
    // Predicated region
    $region14: #{tpu_custom_call.1} parent=1 // pred_check
      _
    $region15: #{tpu_custom_call.1} parent=1 // pred_check_branch
      %30 = sbr.rel (0) target = $region17
    $region16: #{tpu_custom_call.1} parent=1 // pred_region
      _
    $region17: #{tpu_custom_call.1} parent=1 // pred_fallthru
      _
    // Predicated region
    $region18: #{tpu_custom_call.1} parent=1 // pred_check
      _
    $region19: #{tpu_custom_call.1} parent=1 // pred_check_branch
      %32 = sbr.rel (0) target = $region21
    $region20: #{tpu_custom_call.1} parent=1 // pred_region
      _
    $region21: #{tpu_custom_call.1} parent=1 // pred_fallthru
      _
    // Predicated region
    $region22: #{tpu_custom_call.1} parent=1 // pred_check
      _
    $region23: #{tpu_custom_call.1} parent=1 // pred_check_branch
      %34 = sbr.rel (0) target = $region25
    $region24: #{tpu_custom_call.1} parent=1 // pred_region
      _
    $region25: #{tpu_custom_call.1} parent=1 // pred_fallthru
      _
    // Predicated region
    $region26: #{tpu_custom_call.1} parent=1 // pred_check
      _
    $region27: #{tpu_custom_call.1} parent=1 // pred_check_branch
      %36 = sbr.rel (0) target = $region29
    $region28: #{tpu_custom_call.1} parent=1 // pred_region
      %37 = dma.done [#allocation5], 2048
    $region29: #{tpu_custom_call.1} parent=1 // pred_fallthru
      _
    %p38 = scmp.eq.s32.totalorder 0, 0
    // Predicated region
    $region30: #{tpu_custom_call.1} parent=1 // pred_check
      %p39 = pneg %p38
    $region31: #{tpu_custom_call.1} parent=1 // pred_check_branch
      %41 = sbr.rel (%p39) target = $region33
    $region32: #{tpu_custom_call.1} parent=1 // pred_region
      %vm42 = vcmask 254976
      %43 = vst.msk [vmem:[#allocation2] sm:$0x3] %vm42, 0.0
      %44 = vst.msk [vmem:[#allocation3] sm:$0x3] %vm42, -inf
    $region33: #{tpu_custom_call.1} parent=1 // pred_fallthru
      _
    %v45 = vld [vmem:[#allocation4] sm:$0xff]
    %v46 = vld [vmem:[#allocation4 + $0x8] sm:$0xff]
    %v47 = vld [vmem:[#allocation4 + $0x10] sm:$0xff]
    %v48 = vld [vmem:[#allocation4 + $0x18] sm:$0xff]
    %v49 = vld [vmem:[#allocation4 + $0x20] sm:$0xff]
    %v50 = vld [vmem:[#allocation4 + $0x28] sm:$0xff]
    %v51 = vld [vmem:[#allocation4 + $0x30] sm:$0xff]
    %v52 = vld [vmem:[#allocation4 + $0x38] sm:$0xff]
    %v53 = vld [vmem:[#allocation4 + $0x40] sm:$0xff]
    %v54 = vld [vmem:[#allocation4 + $0x48] sm:$0xff]
    %v55 = vld [vmem:[#allocation4 + $0x50] sm:$0xff]
    %v56 = vld [vmem:[#allocation4 + $0x58] sm:$0xff]
    %v57 = vld [vmem:[#allocation4 + $0x60] sm:$0xff]
    %v58 = vld [vmem:[#allocation4 + $0x68] sm:$0xff]
    %v59 = vld [vmem:[#allocation4 + $0x70] sm:$0xff]
    %v60 = vld [vmem:[#allocation4 + $0x78] sm:$0xff]
    %v61 = vld [vmem:[#allocation2] sm:$0x3]
    %v62 = vadd.f32 %v45, %v46
    %63 = vadd.xlane.f32.xlu0 %v62
    %v64 = vpop.xlane.xlu0 %63
    %v65 = vadd.f32 %v47, %v48
    %66 = vadd.xlane.f32.xlu0 %v65
    %v67 = vpop.xlane.xlu0 %66
    %v68 = vadd.f32 %v49, %v50
    %69 = vadd.xlane.f32.xlu0 %v68
    %v70 = vpop.xlane.xlu0 %69
    %v71 = vadd.f32 %v51, %v52
    %72 = vadd.xlane.f32.xlu0 %v71
    %v73 = vpop.xlane.xlu0 %72
    %v74 = vadd.f32 %v53, %v54
    %75 = vadd.xlane.f32.xlu0 %v74
    %v76 = vpop.xlane.xlu0 %75
    %v77 = vadd.f32 %v55, %v56
    %78 = vadd.xlane.f32.xlu0 %v77
    %v79 = vpop.xlane.xlu0 %78
    %v80 = vadd.f32 %v57, %v58
    %81 = vadd.xlane.f32.xlu0 %v80
    %v82 = vpop.xlane.xlu0 %81
    %v83 = vadd.f32 %v59, %v60
    %84 = vadd.xlane.f32.xlu0 %v83
    %v85 = vpop.xlane.xlu0 %84
    %v94 = vlaneseq
    %v95 = vand.u32 %v94, 127
    %v96 = vlaneseq
    %v97 = vshrl.u32 %v96, 7
    %v98 = vsub.s32 %v95, %v97
    %v99 = vrot.slane %v64, %v98
    %v100 = vadd.s32 %v95, 4294967288
    %v101 = vlaneseq
    %v102 = vshrl.u32 %v101, 7
    %v103 = vsub.s32 %v100, %v102
    %v104 = vrot.slane %v67, %v103
    %vm105 = vcmask 130112
    %v106 = vsel %vm105, %v104, %v99
    %v107 = vadd.s32 %v95, 4294967280
    %v108 = vlaneseq
    %v109 = vshrl.u32 %v108, 7
    %v110 = vsub.s32 %v107, %v109
    %v111 = vrot.slane %v70, %v110
    %vm112 = vcmask 195712
    %v113 = vsel %vm112, %v111, %v106
    %v114 = vadd.s32 %v95, 4294967272
    %v115 = vlaneseq
    %v116 = vshrl.u32 %v115, 7
    %v117 = vsub.s32 %v114, %v116
    %v118 = vrot.slane %v73, %v117
    %vm119 = vcmask 261312
    %v120 = vsel %vm119, %v118, %v113
    %v121 = vlaneseq
    %v122 = vshrl.u32 %v121, 7
    %v123 = vsub.s32 %v95, %v122
    %v124 = vrot.slane %v76, %v123
    %v125 = vlaneseq
    %v126 = vshrl.u32 %v125, 7
    %v127 = vsub.s32 %v100, %v126
    %v128 = vrot.slane %v79, %v127
    %v129 = vsel %vm105, %v128, %v124
    %v130 = vlaneseq
    %v131 = vshrl.u32 %v130, 7
    %v132 = vsub.s32 %v107, %v131
    %v133 = vrot.slane %v82, %v132
    %v134 = vsel %vm112, %v133, %v129
    %v135 = vlaneseq
    %v136 = vshrl.u32 %v135, 7
    %v137 = vsub.s32 %v114, %v136
    %v138 = vrot.slane %v85, %v137
    %v139 = vsel %vm119, %v138, %v134
    %vm140 = vcmask 1041409
    %v141 = vsel %vm140, %v139, %v120
    %v143 = vadd.f32 %v61, %v141
    %vm144 = vcmask 254976
    %145 = vst.msk [vmem:[#allocation2] sm:$0x3] %vm144, %v143
    %v146 = vld [vmem:[#allocation3] sm:$0x3]
    %v147 = vmax.f32 %v45, %v46
    %148 = vmax.xlane.f32.xlu0 %v147
    %v149 = vpop.xlane.xlu0 %148
    %v150 = vmax.f32 %v47, %v48
    %151 = vmax.xlane.f32.xlu0 %v150
    %v152 = vpop.xlane.xlu0 %151
    %v153 = vmax.f32 %v49, %v50
    %154 = vmax.xlane.f32.xlu0 %v153
    %v155 = vpop.xlane.xlu0 %154
    %v156 = vmax.f32 %v51, %v52
    %157 = vmax.xlane.f32.xlu0 %v156
    %v158 = vpop.xlane.xlu0 %157
    %v159 = vmax.f32 %v53, %v54
    %160 = vmax.xlane.f32.xlu0 %v159
    %v161 = vpop.xlane.xlu0 %160
    %v162 = vmax.f32 %v55, %v56
    %163 = vmax.xlane.f32.xlu0 %v162
    %v164 = vpop.xlane.xlu0 %163
    %v165 = vmax.f32 %v57, %v58
    %166 = vmax.xlane.f32.xlu0 %v165
    %v167 = vpop.xlane.xlu0 %166
    %v168 = vmax.f32 %v59, %v60
    %169 = vmax.xlane.f32.xlu0 %v168
    %v170 = vpop.xlane.xlu0 %169
    %v179 = vlaneseq
    %v180 = vshrl.u32 %v179, 7
    %v181 = vsub.s32 %v95, %v180
    %v182 = vrot.slane %v149, %v181
    %v183 = vlaneseq
    %v184 = vshrl.u32 %v183, 7
    %v185 = vsub.s32 %v100, %v184
    %v186 = vrot.slane %v152, %v185
    %v187 = vsel %vm105, %v186, %v182
    %v188 = vlaneseq
    %v189 = vshrl.u32 %v188, 7
    %v190 = vsub.s32 %v107, %v189
    %v191 = vrot.slane %v155, %v190
    %v192 = vsel %vm112, %v191, %v187
    %v193 = vlaneseq
    %v194 = vshrl.u32 %v193, 7
    %v195 = vsub.s32 %v114, %v194
    %v196 = vrot.slane %v158, %v195
    %v197 = vsel %vm119, %v196, %v192
    %v198 = vlaneseq
    %v199 = vshrl.u32 %v198, 7
    %v200 = vsub.s32 %v95, %v199
    %v201 = vrot.slane %v161, %v200
    %v202 = vlaneseq
    %v203 = vshrl.u32 %v202, 7
    %v204 = vsub.s32 %v100, %v203
    %v205 = vrot.slane %v164, %v204
    %v206 = vsel %vm105, %v205, %v201
    %v207 = vlaneseq
    %v208 = vshrl.u32 %v207, 7
    %v209 = vsub.s32 %v107, %v208
    %v210 = vrot.slane %v167, %v209
    %v211 = vsel %vm112, %v210, %v206
    %v212 = vlaneseq
    %v213 = vshrl.u32 %v212, 7
    %v214 = vsub.s32 %v114, %v213
    %v215 = vrot.slane %v170, %v214
    %v216 = vsel %vm119, %v215, %v211
    %v217 = vsel %vm140, %v216, %v197
    %v219 = vmax.f32 %v146, %v217
    %220 = vst.msk [vmem:[#allocation3] sm:$0x3] %vm144, %v219
    // Predicated region
    $region34: #{tpu_custom_call.1} parent=1 // pred_check
      %p221 = pneg %p38
    $region35: #{tpu_custom_call.1} parent=1 // pred_check_branch
      %223 = sbr.rel (%p221) target = $region37
    $region36: #{tpu_custom_call.1} parent=1 // pred_region
      %v224 = vld [vmem:[%s1] sm:$0x1]
      %v225 = vld [vmem:[%s1 + $0x1] sm:$0x1]
      %v226 = vld [vmem:[#allocation2] sm:$0x3]
      %v227 = vmul.f32 %v226, 0.00390625
      %v228 = vld [vmem:[#allocation3] sm:$0x3]
      %v230 = vrot.slane %v228, 6
      %vm232 = vcmask 1041408
      %v233 = vsel %vm232, %v227, %v230
      %v236 = vcombine.low %v224, %v225
      %v238 = vunpack.c.l.s4 1966171168
      %v239 = vunpack.c.0.s8 %v238
      %v240 = vlaneseq
      %v241 = vshrl.u32 %v240, 7
      %v242 = vsub.s32 %v239, %v241
      %v243 = vrot.slane %v236, %v242
      %v245 = vunpack.c.l.s4 1966171168
      %v246 = vunpack.c.0.s8 %v245
      %v247 = vlaneseq
      %v248 = vshrl.u32 %v247, 7
      %v249 = vsub.s32 %v246, %v248
      %v250 = vrot.slane %v243, %v249
      %v252 = vcombine.low %v243, %v243
      %v254 = vunpack.c.l.s4 1966171168
      %v255 = vunpack.c.0.s8 %v254
      %v256 = vlaneseq
      %v257 = vshrl.u32 %v256, 7
      %v258 = vsub.s32 %v255, %v257
      %v259 = vrot.slane %v252, %v258
      %v261 = vsel %vm232, %v250, %v259
      %v262 = vld [vmem:[%s2] sm:$0xff]
      %v263 = vld [vmem:[%s2 + $0x8] sm:$0xff]
      %v264 = vld [vmem:[%s2 + $0x10] sm:$0xff]
      %v265 = vld [vmem:[%s2 + $0x18] sm:$0xff]
      %v266 = vld [vmem:[%s2 + $0x20] sm:$0xff]
      %v267 = vld [vmem:[%s2 + $0x28] sm:$0xff]
      %v268 = vld [vmem:[%s2 + $0x30] sm:$0xff]
      %v269 = vld [vmem:[%s2 + $0x38] sm:$0xff]
      %v270 = vld [vmem:[%s3] sm:$0x1]
      %v272 = vlaneseq
      %v273 = vshrl.u32 %v272, 7
      %v274 = vsub.s32 0, %v273
      %v275 = vrot.slane %v270, %v274
      %vm277 = vcmask 523264
      %v279 = vsel %vm277, %v261, 0
      %281 = vmatprep.subr.mxu0 0.0
      %282 = vmatpush1.msra.mxu0 0.0
      %283 = vmatprep.subr.mxu0 0.0
      %284 = vmatpush1.msra.mxu0 0.0
      %285 = vmatprep.subr.mxu0 0.0
      %286 = vmatpush1.msra.mxu0 0.0
      %287 = vmatprep.subr.mxu0 0.0
      %288 = vmatpush1.msra.mxu0 0.0
      %289 = vmatprep.subr.mxu0 0.0
      %290 = vmatpush1.msra.mxu0 0.0
      %291 = vmatprep.subr.mxu0 0.0
      %292 = vmatpush1.msra.mxu0 0.0
      %293 = vmatprep.subr.mxu0 0.0
      %294 = vmatpush1.msra.mxu0 0.0
      %295 = vmatprep.subr.mxu0 0.0
      %296 = vmatpush1.msra.mxu0 0.0
      %297 = vmatprep.subr.mxu0 0.0
      %298 = vmatpush1.msra.mxu0 %v269
      %299 = vmatprep.subr.mxu0 0.0
      %300 = vmatpush1.msra.mxu0 %v268
      %301 = vmatprep.subr.mxu0 0.0
      %302 = vmatpush1.msra.mxu0 %v267
      %303 = vmatprep.subr.mxu0 0.0
      %304 = vmatpush1.msra.mxu0 %v266
      %305 = vmatprep.subr.mxu0 0.0
      %306 = vmatpush1.msra.mxu0 %v265
      %307 = vmatprep.subr.mxu0 0.0
      %308 = vmatpush1.msra.mxu0 %v264
      %309 = vmatprep.subr.mxu0 0.0
      %310 = vmatpush1.msra.mxu0 %v263
      %311 = vmatprep.subr.mxu0 0.0
      %312 = vmatpush1.msra.mxu0 %v262
      %313 = vmatprep.subr.mxu0 0.0
      %314 = vmatpush2.msra.mxu0 0.0
      %315 = vmatprep.subr.mxu0 0.0
      %316 = vmatpush2.msra.mxu0 0.0
      %317 = vmatprep.subr.mxu0 0.0
      %318 = vmatpush2.msra.mxu0 0.0
      %319 = vmatprep.subr.mxu0 0.0
      %320 = vmatpush2.msra.mxu0 0.0
      %321 = vmatprep.subr.mxu0 0.0
      %322 = vmatpush2.msra.mxu0 0.0
      %323 = vmatprep.subr.mxu0 0.0
      %324 = vmatpush2.msra.mxu0 0.0
      %325 = vmatprep.subr.mxu0 0.0
      %326 = vmatpush2.msra.mxu0 0.0
      %327 = vmatprep.subr.mxu0 0.0
      %328 = vmatpush2.msra.mxu0 0.0
      %329 = vmatprep.subr.mxu0 0.0
      %330 = vmatpush2.msra.mxu0 0.0
      %331 = vmatprep.subr.mxu0 0.0
      %332 = vmatpush2.msra.mxu0 0.0
      %333 = vmatprep.subr.mxu0 0.0
      %334 = vmatpush2.msra.mxu0 0.0
      %335 = vmatprep.subr.mxu0 0.0
      %336 = vmatpush2.msra.mxu0 0.0
      %337 = vmatprep.subr.mxu0 0.0
      %338 = vmatpush2.msra.mxu0 0.0
      %339 = vmatprep.subr.mxu0 0.0
      %340 = vmatpush2.msra.mxu0 0.0
      %341 = vmatprep.subr.mxu0 0.0
      %342 = vmatpush2.msra.mxu0 0.0
      %343 = vmatprep.subr.mxu0 0.0
      %344 = vmatpush2.msra.mxu0 0.0
      %345 = vmatprep.mubr.f32.mxu0 0.0
      %346 = vmatmul.mubr.f32.gmra.mxu0 %v279
      %v347 = vpop.f32.mrf.mxu0
      %v348 = vadd.f32 %v275, %v347
      %v349 = vpop.f32.mrf.mxu0
      %350 = vdwg.mxu0
      %v351 = vld [vmem:[%s4] sm:$0xff]
      %v352 = vld [vmem:[%s4 + $0x8] sm:$0xff]
      %v353 = vld [vmem:[%s4 + $0x10] sm:$0xff]
      %v354 = vld [vmem:[%s4 + $0x18] sm:$0xff]
      %vm355 = vcmask 261120
      %v357 = vsel %vm355, %v233, 0
      %359 = vmatprep.subr.mxu0 0.0
      %360 = vmatpush1.msra.mxu0 0.0
      %361 = vmatprep.subr.mxu0 0.0
      %362 = vmatpush1.msra.mxu0 0.0
      %363 = vmatprep.subr.mxu0 0.0
      %364 = vmatpush1.msra.mxu0 0.0
      %365 = vmatprep.subr.mxu0 0.0
      %366 = vmatpush1.msra.mxu0 0.0
      %367 = vmatprep.subr.mxu0 0.0
      %368 = vmatpush1.msra.mxu0 0.0
      %369 = vmatprep.subr.mxu0 0.0
      %370 = vmatpush1.msra.mxu0 0.0
      %371 = vmatprep.subr.mxu0 0.0
      %372 = vmatpush1.msra.mxu0 0.0
      %373 = vmatprep.subr.mxu0 0.0
      %374 = vmatpush1.msra.mxu0 0.0
      %375 = vmatprep.subr.mxu0 0.0
      %376 = vmatpush1.msra.mxu0 0.0
      %377 = vmatprep.subr.mxu0 0.0
      %378 = vmatpush1.msra.mxu0 0.0
      %379 = vmatprep.subr.mxu0 0.0
      %380 = vmatpush1.msra.mxu0 0.0
      %381 = vmatprep.subr.mxu0 0.0
      %382 = vmatpush1.msra.mxu0 0.0
      %383 = vmatprep.subr.mxu0 0.0
      %384 = vmatpush1.msra.mxu0 %v354
      %385 = vmatprep.subr.mxu0 0.0
      %386 = vmatpush1.msra.mxu0 %v353
      %387 = vmatprep.subr.mxu0 0.0
      %388 = vmatpush1.msra.mxu0 %v352
      %389 = vmatprep.subr.mxu0 0.0
      %390 = vmatpush1.msra.mxu0 %v351
      %391 = vmatprep.subr.mxu0 0.0
      %392 = vmatpush2.msra.mxu0 0.0
      %393 = vmatprep.subr.mxu0 0.0
      %394 = vmatpush2.msra.mxu0 0.0
      %395 = vmatprep.subr.mxu0 0.0
      %396 = vmatpush2.msra.mxu0 0.0
      %397 = vmatprep.subr.mxu0 0.0
      %398 = vmatpush2.msra.mxu0 0.0
      %399 = vmatprep.subr.mxu0 0.0
      %400 = vmatpush2.msra.mxu0 0.0
      %401 = vmatprep.subr.mxu0 0.0
      %402 = vmatpush2.msra.mxu0 0.0
      %403 = vmatprep.subr.mxu0 0.0
      %404 = vmatpush2.msra.mxu0 0.0
      %405 = vmatprep.subr.mxu0 0.0
      %406 = vmatpush2.msra.mxu0 0.0
      %407 = vmatprep.subr.mxu0 0.0
      %408 = vmatpush2.msra.mxu0 0.0
      %409 = vmatprep.subr.mxu0 0.0
      %410 = vmatpush2.msra.mxu0 0.0
      %411 = vmatprep.subr.mxu0 0.0
      %412 = vmatpush2.msra.mxu0 0.0
      %413 = vmatprep.subr.mxu0 0.0
      %414 = vmatpush2.msra.mxu0 0.0
      %415 = vmatprep.subr.mxu0 0.0
      %416 = vmatpush2.msra.mxu0 0.0
      %417 = vmatprep.subr.mxu0 0.0
      %418 = vmatpush2.msra.mxu0 0.0
      %419 = vmatprep.subr.mxu0 0.0
      %420 = vmatpush2.msra.mxu0 0.0
      %421 = vmatprep.subr.mxu0 0.0
      %422 = vmatpush2.msra.mxu0 0.0
      %423 = vmatprep.mubr.f32.mxu0 0.0
      %424 = vmatmul.mubr.f32.gmra.mxu0 %v357
      %v425 = vpop.f32.mrf.mxu0
      %v426 = vadd.f32 0.0, %v425
      %v427 = vpop.f32.mrf.mxu0
      %428 = vdwg.mxu0
      %430 = vset.pattern.permute.xlu0 0
      %431 = vperm.xlu0 %430, %v348
      %v432 = vpop.permute.xlu0 %431
      %v434 = vmul.f32 %v426, %v432
      %436 = vrot.lane.b32.xlu0 %v434, 8
      %v437 = vpop.permute.xlu0 %436
      %v439 = vadd.f32 %v348, %v437
      %440 = vset.pattern.permute.xlu0 1
      %441 = vperm.xlu0 %440, %v348
      %v442 = vpop.permute.xlu0 %441
      %v444 = vmul.f32 %v426, %v442
      %v445 = vadd.f32 %v439, %v444
      %446 = vset.pattern.permute.xlu0 2
      %447 = vperm.xlu0 %446, %v348
      %v448 = vpop.permute.xlu0 %447
      %v450 = vmul.f32 %v426, %v448
      %452 = vrot.lane.b32.xlu0 %v450, 120
      %v453 = vpop.permute.xlu0 %452
      %v455 = vadd.f32 %v445, %v453
      %456 = vset.pattern.permute.xlu0 3
      %457 = vperm.xlu0 %456, %v348
      %v458 = vpop.permute.xlu0 %457
      %v460 = vmul.f32 %v426, %v458
      %462 = vrot.lane.b32.xlu0 %v460, 112
      %v463 = vpop.permute.xlu0 %462
      %v465 = vadd.f32 %v455, %v463
      %466 = vset.pattern.permute.xlu0 4
      %467 = vperm.xlu0 %466, %v348
      %v468 = vpop.permute.xlu0 %467
      %v470 = vmul.f32 %v426, %v468
      %472 = vrot.lane.b32.xlu0 %v470, 104
      %v473 = vpop.permute.xlu0 %472
      %v475 = vadd.f32 %v465, %v473
      %476 = vset.pattern.permute.xlu0 5
      %477 = vperm.xlu0 %476, %v348
      %v478 = vpop.permute.xlu0 %477
      %v480 = vmul.f32 %v426, %v478
      %482 = vrot.lane.b32.xlu0 %v480, 96
      %v483 = vpop.permute.xlu0 %482
      %v485 = vadd.f32 %v475, %v483
      %486 = vset.pattern.permute.xlu0 6
      %487 = vperm.xlu0 %486, %v348
      %v488 = vpop.permute.xlu0 %487
      %v490 = vmul.f32 %v426, %v488
      %492 = vrot.lane.b32.xlu0 %v490, 88
      %v493 = vpop.permute.xlu0 %492
      %v495 = vadd.f32 %v485, %v493
      %496 = vset.pattern.permute.xlu0 7
      %497 = vperm.xlu0 %496, %v348
      %v498 = vpop.permute.xlu0 %497
      %v500 = vmul.f32 %v426, %v498
      %502 = vrot.lane.b32.xlu0 %v500, 80
      %v503 = vpop.permute.xlu0 %502
      %v505 = vadd.f32 %v495, %v503
      %vm506 = vcmp.gt.f32.partialorder %v505, 0.0
      %v507 = vmul.f32 %v505, 0.2
      %v508 = vsel %vm506, %v505, %v507
      %v509 = vld [vmem:[%s5] sm:$0xff]
      %v510 = vld [vmem:[%s5 + $0x8] sm:$0xff]
      %512 = vrot.lane.b32.xlu0 %v508, 120
      %v513 = vpop.permute.xlu0 %512
      %vm514 = vcmask 64512
      %v515 = vsel %vm514, %v513, 0
      %517 = vmatprep.subr.mxu0 0.0
      %518 = vmatpush1.msra.mxu0 0.0
      %519 = vmatprep.subr.mxu0 0.0
      %520 = vmatpush1.msra.mxu0 0.0
      %521 = vmatprep.subr.mxu0 0.0
      %522 = vmatpush1.msra.mxu0 0.0
      %523 = vmatprep.subr.mxu0 0.0
      %524 = vmatpush1.msra.mxu0 0.0
      %525 = vmatprep.subr.mxu0 0.0
      %526 = vmatpush1.msra.mxu0 0.0
      %527 = vmatprep.subr.mxu0 0.0
      %528 = vmatpush1.msra.mxu0 0.0
      %529 = vmatprep.subr.mxu0 0.0
      %530 = vmatpush1.msra.mxu0 0.0
      %531 = vmatprep.subr.mxu0 0.0
      %532 = vmatpush1.msra.mxu0 0.0
      %533 = vmatprep.subr.mxu0 0.0
      %534 = vmatpush1.msra.mxu0 0.0
      %535 = vmatprep.subr.mxu0 0.0
      %536 = vmatpush1.msra.mxu0 0.0
      %537 = vmatprep.subr.mxu0 0.0
      %538 = vmatpush1.msra.mxu0 0.0
      %539 = vmatprep.subr.mxu0 0.0
      %540 = vmatpush1.msra.mxu0 0.0
      %541 = vmatprep.subr.mxu0 0.0
      %542 = vmatpush1.msra.mxu0 0.0
      %543 = vmatprep.subr.mxu0 0.0
      %544 = vmatpush1.msra.mxu0 0.0
      %545 = vmatprep.subr.mxu0 0.0
      %546 = vmatpush1.msra.mxu0 0.0
      %547 = vmatprep.subr.mxu0 %v510
      %548 = vmatpush1.msra.mxu0 %v509
      %549 = vmatprep.subr.mxu0 0.0
      %550 = vmatpush2.msra.mxu0 0.0
      %551 = vmatprep.subr.mxu0 0.0
      %552 = vmatpush2.msra.mxu0 0.0
      %553 = vmatprep.subr.mxu0 0.0
      %554 = vmatpush2.msra.mxu0 0.0
      %555 = vmatprep.subr.mxu0 0.0
      %556 = vmatpush2.msra.mxu0 0.0
      %557 = vmatprep.subr.mxu0 0.0
      %558 = vmatpush2.msra.mxu0 0.0
      %559 = vmatprep.subr.mxu0 0.0
      %560 = vmatpush2.msra.mxu0 0.0
      %561 = vmatprep.subr.mxu0 0.0
      %562 = vmatpush2.msra.mxu0 0.0
      %563 = vmatprep.subr.mxu0 0.0
      %564 = vmatpush2.msra.mxu0 0.0
      %565 = vmatprep.subr.mxu0 0.0
      %566 = vmatpush2.msra.mxu0 0.0
      %567 = vmatprep.subr.mxu0 0.0
      %568 = vmatpush2.msra.mxu0 0.0
      %569 = vmatprep.subr.mxu0 0.0
      %570 = vmatpush2.msra.mxu0 0.0
      %571 = vmatprep.subr.mxu0 0.0
      %572 = vmatpush2.msra.mxu0 0.0
      %573 = vmatprep.subr.mxu0 0.0
      %574 = vmatpush2.msra.mxu0 0.0
      %575 = vmatprep.subr.mxu0 0.0
      %576 = vmatpush2.msra.mxu0 0.0
      %577 = vmatprep.subr.mxu0 0.0
      %578 = vmatpush2.msra.mxu0 0.0
      %579 = vmatprep.subr.mxu0 0.0
      %580 = vmatpush2.msra.mxu0 0.0
      %581 = vmatprep.mubr.f32.mxu0 0.0
      %582 = vmatmul.mubr.f32.gmra.mxu0 %v515
      %v583 = vpop.f32.mrf.mxu0
      %v584 = vadd.f32 0.0, %v583
      %v585 = vpop.f32.mrf.mxu0
      %v586 = vadd.f32 0.0, %v585
      %587 = vdwg.mxu0
      %588 = vset.pattern.permute.xlu0 16
      %589 = vperm.xlu0 %588, %v348
      %v590 = vpop.permute.xlu0 %589
      %v592 = vmul.f32 %v584, %v590
      %594 = vrot.lane.b32.xlu0 %v592, 24
      %v595 = vpop.permute.xlu0 %594
      %v597 = vadd.f32 %v348, %v595
      %598 = vset.pattern.permute.xlu0 17
      %599 = vperm.xlu0 %598, %v348
      %v600 = vpop.permute.xlu0 %599
      %v602 = vmul.f32 %v584, %v600
      %604 = vrot.lane.b32.xlu0 %v602, 120
      %v605 = vpop.permute.xlu0 %604
      %v607 = vadd.f32 %v597, %v605
      %608 = vset.pattern.permute.xlu0 18
      %609 = vperm.xlu0 %608, %v348
      %v610 = vpop.permute.xlu0 %609
      %v612 = vmul.f32 %v584, %v610
      %614 = vrot.lane.b32.xlu0 %v612, 88
      %v615 = vpop.permute.xlu0 %614
      %v617 = vadd.f32 %v607, %v615
      %618 = vset.pattern.permute.xlu0 19
      %619 = vperm.xlu0 %618, %v348
      %v620 = vpop.permute.xlu0 %619
      %v622 = vmul.f32 %v584, %v620
      %624 = vrot.lane.b32.xlu0 %v622, 56
      %v625 = vpop.permute.xlu0 %624
      %v627 = vadd.f32 %v617, %v625
      %628 = vset.pattern.permute.xlu0 20
      %629 = vperm.xlu0 %628, %v348
      %v630 = vpop.permute.xlu0 %629
      %v632 = vmul.f32 %v586, %v630
      %634 = vrot.lane.b32.xlu0 %v632, 24
      %v635 = vpop.permute.xlu0 %634
      %v637 = vadd.f32 %v627, %v635
      %638 = vset.pattern.permute.xlu0 21
      %639 = vperm.xlu0 %638, %v348
      %v640 = vpop.permute.xlu0 %639
      %v642 = vmul.f32 %v586, %v640
      %644 = vrot.lane.b32.xlu0 %v642, 120
      %v645 = vpop.permute.xlu0 %644
      %v647 = vadd.f32 %v637, %v645
      %648 = vset.pattern.permute.xlu0 22
      %649 = vperm.xlu0 %648, %v348
      %v650 = vpop.permute.xlu0 %649
      %v652 = vmul.f32 %v586, %v650
      %654 = vrot.lane.b32.xlu0 %v652, 88
      %v655 = vpop.permute.xlu0 %654
      %v657 = vadd.f32 %v647, %v655
      %658 = vset.pattern.permute.xlu0 23
      %659 = vperm.xlu0 %658, %v348
      %v660 = vpop.permute.xlu0 %659
      %v662 = vmul.f32 %v586, %v660
      %664 = vrot.lane.b32.xlu0 %v662, 56
      %v665 = vpop.permute.xlu0 %664
      %v667 = vadd.f32 %v657, %v665
      %v669 = vrot.slane %v667, 2
      %v671 = vadd.f32 %v667, %v669
      %v672 = vsub.f32 0.0, %v671
      %v673 = vmul.f32 %v672, 1.442695
      %v674 = vpow.pop %v673
      %v675 = vadd.f32 %v674, 1.0
      %v676 = vrcp.pop %v675
      %v677 = vmul.f32 1.0, %v676
      %v680 = vunpack.c.l.s4 1966171168
      %v681 = vunpack.c.0.s8 %v680
      %v682 = vlaneseq
      %v683 = vshrl.u32 %v682, 7
      %v684 = vsub.s32 %v681, %v683
      %v685 = vrot.slane %v677, %v684
      %v686 = vcombine.high %v685, %v685
      %v688 = vunpack.c.l.s4 1966171168
      %v689 = vunpack.c.0.s8 %v688
      %v690 = vlaneseq
      %v691 = vshrl.u32 %v690, 7
      %v692 = vsub.s32 %v689, %v691
      %v693 = vrot.slane %v685, %v692
      %v695 = vunpack.c.l.s4 1966171168
      %v696 = vunpack.c.0.s8 %v695
      %v697 = vlaneseq
      %v698 = vshrl.u32 %v697, 7
      %v699 = vsub.s32 %v696, %v698
      %v700 = vrot.slane %v686, %v699
      %v701 = vlaneseq
      %v702 = vshrl.u32 %v701, 7
      %v703 = vsub.s32 0, %v702
      %v704 = vrot.slane %v693, %v703
      %v705 = vlaneseq
      %v706 = vshrl.u32 %v705, 7
      %v707 = vsub.s32 0, %v706
      %v708 = vrot.slane %v700, %v707
      %709 = vrot.lane.b32.xlu0 %v704, 104
      %v710 = vpop.permute.xlu0 %709
      %711 = vrot.lane.b32.xlu0 %v708, 104
      %v712 = vpop.permute.xlu0 %711
      %vm715 = vcmask 253952
      %716 = vst.msk [vmem:[#allocation7] sm:$0x1] %vm715, %v710
      %717 = vst.msk [vmem:[#allocation7 + $0x1] sm:$0x1] %vm715, %v712
    $region37: #{tpu_custom_call.1} parent=1 // pred_fallthru
      _
    // Predicated region
    $region38: #{tpu_custom_call.1} parent=1 // pred_check
      _
    $region39: #{tpu_custom_call.1} parent=1 // pred_check_branch
      %719 = sbr.rel (0) target = $region41
    $region40: #{tpu_custom_call.1} parent=1 // pred_region
      %s721 = ssub.s32 32, 32
      %722 = vsyncadd [#allocation6], %s721
      %s723 = sshll.u32 [#allocation7], 4
      %s724 = int_to_ptr.vmem [resolvable:$true] %s723
      %729 = dma.vmem_to_hbm [thread:$0]  %s724, 32, %s6, [#allocation6], 16, 16, 1
    $region41: #{tpu_custom_call.1} parent=1 // pred_fallthru
      _
    // Predicated region
    $region42: #{tpu_custom_call.1} parent=1 // pred_check
      _
    $region43: #{tpu_custom_call.1} parent=1 // pred_check_branch
      %731 = sbr.rel (0) target = $region45
    $region44: #{tpu_custom_call.1} parent=1 // pred_region
      %732 = dma.done [#allocation6], 32
    $region45: #{tpu_custom_call.1} parent=1 // pred_fallthru
      _
    %733 = vsyncpa [#allocation5], 1
    %734 = vsyncpa [#allocation6], 1

</llo_original>
